<compile_context>
chip_gen: v7x
topology: tpu7x:2x2x1
jax: 0.10.0
libtpu: 0.0.40
codegen_flags: <defaults>
</compile_context>

<pallas_src>
import functools

import numpy as np
import jax
import jax.numpy as jnp
from jax import lax
from jax.experimental import pallas as pl
from jax.experimental.pallas import tpu as pltpu


def _round_up(a: int, b: int) -> int:
    return (a + b - 1) // b * b


def _cdiv(a: int, b: int) -> int:
    return (a + b - 1) // b


def _ldam_ce_kernel(tgt_ref, bm_ref, w_ref, x_ref, out_ref, acc_ref, *,
                    n_valid: int, tiles_per_split: int):
    """One (tn, C) logits tile: fused margin subtraction + cross-entropy partial sum."""
    c = pl.program_id(0)          # batch split (one per TensorCore on v7x)
    i = pl.program_id(1)          # tile within the split (reduction axis)

    @pl.when(i == 0)
    def _init():
        acc_ref[0] = jnp.float32(0.0)

    x = x_ref[...].astype(jnp.float32)     # (tn, C) logits; f32 math in-kernel
    tgt = tgt_ref[...]                     # (tn, 1) int32 target class
    bm = bm_ref[...]                       # (tn, 1) f32 margin of the target class
    w = w_ref[...]                         # (tn, 1) f32 per-sample CE weight

    tn, cdim = x.shape
    col = lax.broadcasted_iota(jnp.int32, (tn, cdim), 1)
    is_tgt = col == tgt                    # bool one-hot (torch scatter_)

    # output = where(one_hot, x - batch_m, x);  nll = logsumexp(output) - output[target]
    out_logits = jnp.where(is_tgt, x - bm, x)
    mx = jnp.max(out_logits, axis=1, keepdims=True)
    lse = jnp.log(jnp.sum(jnp.exp(out_logits - mx), axis=1, keepdims=True))
    tgt_out = jnp.sum(jnp.where(is_tgt, out_logits, 0.0), axis=1, keepdims=True)
    nll = lse + mx - tgt_out               # (tn, 1)

    # Mask batch-tail rows (and duplicated clamped tiles of the last split) out
    # of the reduction; where() (not multiply) so garbage rows from the partial
    # tail DMA can never inject inf/nan into the sum.
    row0 = (c * tiles_per_split + i) * tn
    row = row0 + lax.broadcasted_iota(jnp.int32, (tn, 1), 0)
    acc_ref[0] += jnp.sum(jnp.where(row < n_valid, w * nll, 0.0))

    @pl.when(i == pl.num_programs(1) - 1)
    def _finalize():
        out_ref[...] = jnp.full(out_ref.shape, acc_ref[0], dtype=jnp.float32)


def ldam_loss(x, target, m_list, weight=None, *, tn=None,
              vmem_budget_bytes=24 * 1024 * 1024):
    """LDAMLoss.forward: x (N, C) logits, target (N,) ints, m_list (C,) -> scalar loss."""
    N, C = x.shape
    itemsize = jnp.dtype(x.dtype).itemsize
    sub = 16 if itemsize <= 2 else 8          # bf16 vregs pack 16 sublanes
    lane_c = _round_up(C, 128)
    # VMEM bytes per tile row: lane-padded logits row + three lane-padded (tn,1)
    # side inputs (target / batch_m / weight), each double-buffered by Pallas.
    row_bytes = lane_c * itemsize + 3 * 128 * 4

    # Per-sample gathers in plain JAX (tiny (N,1) arrays).
    tgt2 = target.reshape(N, 1).astype(jnp.int32)
    bm2 = jnp.take(m_list.astype(jnp.float32), target).reshape(N, 1)
    if weight is None:
        w2 = jnp.ones((N, 1), jnp.float32)
        denom = jnp.float32(N)
    else:
        w2 = jnp.take(weight.astype(jnp.float32), target).reshape(N, 1)
        denom = jnp.sum(w2)

    # Tiny-batch edge case: pad a handful of rows so every row block starts
    # inside the array (padded rows are masked out via n_valid / zero weight).
    pad_rows = max(0, sub - N)
    if pad_rows:
        x = jnp.pad(x, ((0, pad_rows), (0, 0)))
        tgt2 = jnp.pad(tgt2, ((0, pad_rows), (0, 0)))
        bm2 = jnp.pad(bm2, ((0, pad_rows), (0, 0)))
        w2 = jnp.pad(w2, ((0, pad_rows), (0, 0)))
    n_rows = N + pad_rows

    # Tile rows: as many as the VMEM budget allows (no artificial cap), rounded
    # to the sublane packing and never exceeding the array extent.
    if tn is None:
        tn = vmem_budget_bytes // (2 * row_bytes)
    tn = _round_up(max(int(tn), sub), sub)
    tn = min(tn, (n_rows // sub) * sub)

    num_blocks = _cdiv(n_rows, tn)
    num_splits = 2 if num_blocks >= 2 else 1  # one partial per TensorCore (v7x)
    tiles_per_split = _cdiv(num_blocks, num_splits)
    last_block = num_blocks - 1

    def _row_block(c, i):
        # Clamp so the duplicated tail tiles of the last split re-read the last
        # real row block; their rows are masked out inside the kernel.
        return jnp.minimum(c * tiles_per_split + i, last_block)

    kernel = functools.partial(_ldam_ce_kernel, n_valid=N,
                               tiles_per_split=tiles_per_split)

    # Explicit scoped-VMEM limit: actual use is ~2*tn*row_bytes (double-buffered
    # inputs) + slack; clamp to <=48 MiB so it fits v7x's 64 MiB per-core VMEM.
    vmem_limit = int(min(48 << 20, max(32 << 20, 2 * tn * row_bytes + (8 << 20))))

    partials = pl.pallas_call(
        kernel,
        out_shape=jax.ShapeDtypeStruct((num_splits, 8, 128), jnp.float32),
        grid=(num_splits, tiles_per_split),
        in_specs=[
            pl.BlockSpec((tn, 1), lambda c, i: (_row_block(c, i), 0)),   # target
            pl.BlockSpec((tn, 1), lambda c, i: (_row_block(c, i), 0)),   # batch_m
            pl.BlockSpec((tn, 1), lambda c, i: (_row_block(c, i), 0)),   # sample weight
            pl.BlockSpec((tn, C), lambda c, i: (_row_block(c, i), 0)),   # logits (no pad copy)
        ],
        out_specs=pl.BlockSpec((1, 8, 128), lambda c, i: (c, 0, 0)),     # per-split partial
        scratch_shapes=[pltpu.SMEM((1,), jnp.float32)],                  # running NLL sum
        compiler_params=pltpu.CompilerParams(
            dimension_semantics=("parallel", "arbitrary"),
            vmem_limit_bytes=vmem_limit),
    )(tgt2, bm2, w2, x)

    return jnp.sum(partials[:, 0, 0]) / denom


def make_m_list(cls_num_list, max_m=0.5):
    # Mirrors LDAMLoss.__init__ (deterministic, no checkpoint load).
    m = 1.0 / np.sqrt(np.sqrt(np.asarray(cls_num_list, dtype=np.float64)))
    m = m * (max_m / np.max(m))
    return jnp.asarray(m, dtype=jnp.float32)


if __name__ == "__main__":
    # Small shapes; N and C deliberately not multiples of 8 / 128 so the
    # unpadded class axis, the partial tail block, and the clamped duplicate
    # tile of the 2-way split are all exercised.
    N, C = 20, 24
    cls_num_list = [int(1000 * (0.7 ** i)) + 1 for i in range(C)]  # long-tailed counts
    m_list = make_m_list(cls_num_list, max_m=0.5)

    key = jax.random.PRNGKey(0)
    kx, kt, kw = jax.random.split(key, 3)
    x = jax.random.normal(kx, (N, C), dtype=jnp.float32)
    target = jax.random.randint(kt, (N,), 0, C, dtype=jnp.int32)
    cls_weight = jax.random.uniform(kw, (C,), dtype=jnp.float32, minval=0.5, maxval=1.5)

    def reference(xf, tgt, m, w=None):
        xf = xf.astype(jnp.float32)
        onehot = jax.nn.one_hot(tgt, xf.shape[1], dtype=jnp.float32)
        batch_m = (onehot * m[None, :]).sum(axis=1, keepdims=True)
        output = jnp.where(onehot > 0, xf - batch_m, xf)
        nll = -jnp.sum(onehot * jax.nn.log_softmax(output, axis=1), axis=1)
        if w is None:
            return jnp.mean(nll)
        wi = w[tgt]
        return jnp.sum(wi * nll) / jnp.sum(wi)

    # 1) f32, explicit small tile -> several grid steps through the SMEM accumulator
    #    plus the clamped duplicate tile of the last split.
    loss = ldam_loss(x, target, m_list, tn=8)
    jax.block_until_ready(loss)
    ref = reference(x, target, m_list)
    assert jnp.allclose(loss, ref, atol=1e-5, rtol=1e-5), (loss, ref)

    # 2) f32, auto tile size + per-class weight (weighted cross-entropy path).
    loss_w = ldam_loss(x, target, m_list, weight=cls_weight)
    jax.block_until_ready(loss_w)
    ref_w = reference(x, target, m_list, cls_weight)
    assert jnp.allclose(loss_w, ref_w, atol=1e-5, rtol=1e-5), (loss_w, ref_w)

    # 3) bf16 logits (half the HBM bytes for x; f32 math in-kernel, 16-row tiles).
    x_bf16 = x.astype(jnp.bfloat16)
    loss_bf16 = ldam_loss(x_bf16, target, m_list)
    jax.block_until_ready(loss_bf16)
    ref_bf16 = reference(x_bf16, target, m_list)
    assert jnp.allclose(loss_bf16, ref_bf16, atol=1e-4, rtol=1e-4), (loss_bf16, ref_bf16)

    print("KERNEL_OK")
</pallas_src>

<mosaic_0001>
module attributes {stable_mosaic.version = 11 : i64} {
  func.func @_ldam_ce_kernel(%arg0: i32, %arg1: i32, %arg2: memref<8x1xi32, #tpu.memory_space<vmem>>, %arg3: memref<8x1xf32, #tpu.memory_space<vmem>>, %arg4: memref<8x1xf32, #tpu.memory_space<vmem>>, %arg5: memref<8x24xf32, #tpu.memory_space<vmem>>, %arg6: memref<1x8x128xf32, #tpu.memory_space<vmem>>, %arg7: memref<1xf32, #tpu.memory_space<smem>>) attributes {dimension_semantics = [#tpu.dimension_semantics<parallel>, #tpu.dimension_semantics<arbitrary>], iteration_bounds = array<i64: 2, 2>, scalar_prefetch = 0 : i64, scratch_operands = 1 : i64, tpu.core_type = #tpu.core_type<tc>, window_params = [{transform_indices = @transform_0, window_bounds = array<i64: 8, 1>}, {transform_indices = @transform_1, window_bounds = array<i64: 8, 1>}, {transform_indices = @transform_2, window_bounds = array<i64: 8, 1>}, {transform_indices = @transform_3, window_bounds = array<i64: 8, 24>}, {transform_indices = @transform_4, window_bounds = array<i64: 1, 8, 128>}]} {
    %c0_i32 = arith.constant 0 : i32
    %0 = arith.cmpi eq, %arg1, %c0_i32 : i32
    %1 = arith.extui %0 : i1 to i32
    %c0_i32_0 = arith.constant 0 : i32
    %2 = arith.cmpi ne, %1, %c0_i32_0 : i32
    scf.if %2 {
      %cst_16 = arith.constant 0.000000e+00 : f32
      %c0_17 = arith.constant 0 : index
      %48 = memref.load %arg7[%c0_17] : memref<1xf32, #tpu.memory_space<smem>>
      memref.store %cst_16, %arg7[%c0_17] : memref<1xf32, #tpu.memory_space<smem>>
    } else {
    }
    %c0 = arith.constant 0 : index
    %c0_1 = arith.constant 0 : index
    %3 = vector.load %arg5[%c0, %c0_1] : memref<8x24xf32, #tpu.memory_space<vmem>>, vector<8x24xf32>
    %c0_2 = arith.constant 0 : index
    %c0_3 = arith.constant 0 : index
    %4 = vector.load %arg2[%c0_2, %c0_3] : memref<8x1xi32, #tpu.memory_space<vmem>>, vector<8x1xi32>
    %c0_4 = arith.constant 0 : index
    %c0_5 = arith.constant 0 : index
    %5 = vector.load %arg3[%c0_4, %c0_5] : memref<8x1xf32, #tpu.memory_space<vmem>>, vector<8x1xf32>
    %c0_6 = arith.constant 0 : index
    %c0_7 = arith.constant 0 : index
    %6 = vector.load %arg4[%c0_6, %c0_7] : memref<8x1xf32, #tpu.memory_space<vmem>>, vector<8x1xf32>
    %7 = tpu.iota {dimensions = array<i32: 1>} : vector<8x24xi32>
    %8 = vector.broadcast %4 : vector<8x1xi32> to vector<8x24xi32>
    %9 = arith.cmpi eq, %7, %8 : vector<8x24xi32>
    %10 = vector.broadcast %5 : vector<8x1xf32> to vector<8x24xf32>
    %11 = arith.subf %3, %10 : vector<8x24xf32>
    %12 = arith.select %9, %11, %3 : vector<8x24xi1>, vector<8x24xf32>
    %cst = arith.constant dense<0xFF800000> : vector<8xf32>
    %13 = vector.multi_reduction <maximumf>, %12, %cst [1] : vector<8x24xf32> to vector<8xf32>
    %14 = vector.shape_cast %13 : vector<8xf32> to vector<8x1xf32>
    %15 = vector.broadcast %14 : vector<8x1xf32> to vector<8x24xf32>
    %16 = arith.subf %12, %15 : vector<8x24xf32>
    %17 = math.exp %16 : vector<8x24xf32>
    %cst_8 = arith.constant dense<0.000000e+00> : vector<8xf32>
    %18 = vector.multi_reduction <add>, %17, %cst_8 [1] : vector<8x24xf32> to vector<8xf32>
    %19 = vector.shape_cast %18 : vector<8xf32> to vector<8x1xf32>
    %20 = math.log %19 : vector<8x1xf32>
    %cst_9 = arith.constant 0.000000e+00 : f32
    %21 = vector.broadcast %cst_9 : f32 to vector<8x24xf32>
    %22 = arith.select %9, %12, %21 : vector<8x24xi1>, vector<8x24xf32>
    %cst_10 = arith.constant dense<0.000000e+00> : vector<8xf32>
    %23 = vector.multi_reduction <add>, %22, %cst_10 [1] : vector<8x24xf32> to vector<8xf32>
    %24 = vector.shape_cast %23 : vector<8xf32> to vector<8x1xf32>
    %25 = arith.addf %20, %14 : vector<8x1xf32>
    %26 = arith.subf %25, %24 : vector<8x1xf32>
    %c2_i32 = arith.constant 2 : i32
    %27 = arith.muli %arg0, %c2_i32 : i32
    %28 = arith.addi %27, %arg1 : i32
    %c8_i32 = arith.constant 8 : i32
    %29 = arith.muli %28, %c8_i32 : i32
    %30 = tpu.iota {dimensions = array<i32: 0>} : vector<8x1xi32>
    %31 = vector.broadcast %29 : i32 to vector<8x1xi32>
    %32 = arith.addi %31, %30 : vector<8x1xi32>
    %c0_11 = arith.constant 0 : index
    %33 = memref.load %arg7[%c0_11] : memref<1xf32, #tpu.memory_space<smem>>
    %c20_i32 = arith.constant 20 : i32
    %34 = vector.broadcast %c20_i32 : i32 to vector<8x1xi32>
    %35 = arith.cmpi slt, %32, %34 : vector<8x1xi32>
    %36 = arith.mulf %6, %26 : vector<8x1xf32>
    %cst_12 = arith.constant 0.000000e+00 : f32
    %37 = vector.broadcast %cst_12 : f32 to vector<8x1xf32>
    %38 = arith.select %35, %36, %37 : vector<8x1xi1>, vector<8x1xf32>
    %39 = vector.shape_cast %38 : vector<8x1xf32> to vector<1x8x1xf32>
    %cst_13 = arith.constant dense<0.000000e+00> : vector<1xf32>
    %40 = vector.multi_reduction <add>, %39, %cst_13 [1, 2] : vector<1x8x1xf32> to vector<1xf32>
    %41 = vector.shape_cast %40 : vector<1xf32> to vector<1x1x1xf32>
    %42 = vector.extract %41[0, 0, 0] : f32 from vector<1x1x1xf32>
    %43 = arith.addf %33, %42 : f32
    %c0_14 = arith.constant 0 : index
    %44 = memref.load %arg7[%c0_14] : memref<1xf32, #tpu.memory_space<smem>>
    memref.store %43, %arg7[%c0_14] : memref<1xf32, #tpu.memory_space<smem>>
    %c1_i32 = arith.constant 1 : i32
    %45 = arith.cmpi eq, %arg1, %c1_i32 : i32
    %46 = arith.extui %45 : i1 to i32
    %c0_i32_15 = arith.constant 0 : i32
    %47 = arith.cmpi ne, %46, %c0_i32_15 : i32
    scf.if %47 {
      %c0_16 = arith.constant 0 : index
      %48 = memref.load %arg7[%c0_16] : memref<1xf32, #tpu.memory_space<smem>>
      %49 = vector.broadcast %48 : f32 to vector<1x8x128xf32>
      %c0_17 = arith.constant 0 : index
      %c0_18 = arith.constant 0 : index
      %c0_19 = arith.constant 0 : index
      %50 = vector.load %arg6[%c0_17, %c0_18, %c0_19] : memref<1x8x128xf32, #tpu.memory_space<vmem>>, vector<1x8x128xf32>
      tpu.vector_store %arg6[%c0_17, %c0_18, %c0_19], %49 {strides = array<i32>} : memref<1x8x128xf32, #tpu.memory_space<vmem>>, vector<1x8x128xf32>,
    } else {
    }
    return
  }
  func.func @transform_0(%arg0: i32, %arg1: i32) -> (i32, i32) {
    %c2_i32 = arith.constant 2 : i32
    %0 = arith.muli %arg0, %c2_i32 : i32
    %1 = arith.addi %0, %arg1 : i32
    %c2_i32_0 = arith.constant 2 : i32
    %2 = arith.minsi %1, %c2_i32_0 : i32
    %c0_i32 = arith.constant 0 : i32
    %c0_i32_1 = arith.constant 0 : i32
    return %2, %c0_i32 : i32, i32
  }
  func.func @transform_1(%arg0: i32, %arg1: i32) -> (i32, i32) {
    %c2_i32 = arith.constant 2 : i32
    %0 = arith.muli %arg0, %c2_i32 : i32
    %1 = arith.addi %0, %arg1 : i32
    %c2_i32_0 = arith.constant 2 : i32
    %2 = arith.minsi %1, %c2_i32_0 : i32
    %c0_i32 = arith.constant 0 : i32
    %c0_i32_1 = arith.constant 0 : i32
    return %2, %c0_i32 : i32, i32
  }
  func.func @transform_2(%arg0: i32, %arg1: i32) -> (i32, i32) {
    %c2_i32 = arith.constant 2 : i32
    %0 = arith.muli %arg0, %c2_i32 : i32
    %1 = arith.addi %0, %arg1 : i32
    %c2_i32_0 = arith.constant 2 : i32
    %2 = arith.minsi %1, %c2_i32_0 : i32
    %c0_i32 = arith.constant 0 : i32
    %c0_i32_1 = arith.constant 0 : i32
    return %2, %c0_i32 : i32, i32
  }
  func.func @transform_3(%arg0: i32, %arg1: i32) -> (i32, i32) {
    %c2_i32 = arith.constant 2 : i32
    %0 = arith.muli %arg0, %c2_i32 : i32
    %1 = arith.addi %0, %arg1 : i32
    %c2_i32_0 = arith.constant 2 : i32
    %2 = arith.minsi %1, %c2_i32_0 : i32
    %c0_i32 = arith.constant 0 : i32
    %c0_i32_1 = arith.constant 0 : i32
    return %2, %c0_i32 : i32, i32
  }
  func.func @transform_4(%arg0: i32, %arg1: i32) -> (i32, i32, i32) {
    %c0_i32 = arith.constant 0 : i32
    %c0_i32_0 = arith.constant 0 : i32
    %c0_i32_1 = arith.constant 0 : i32
    return %arg0, %c0_i32, %c0_i32_0 : i32, i32, i32
  }
}

</mosaic_0001>

<llo_original>
// kernel: tpu_custom_call.1
$region0: #{tpu_custom_call.1}
  #allocation0 [shape = 'u32[]', space=smem, size = 0x4, offset = 0x4, fixed_abs, tag = 'smem constant byte address 0x4 - core index']
  #allocation1 [shape = 'u32[144,128]{1,0:T(1,128)}', space=vmem, size = 0x12000, scoped, tag = 'internal scratch']
  #allocation2 [shape = 'f32[1]{0:T(128)}', space=smem, size = 0x200, scoped, tag = 'scratch operand']
  %s0 = inlined_call_operand.vmem [shape: s32[20,1], index: 0, kind: input, shape index: {}]
  %s1 = inlined_call_operand.vmem [shape: f32[20,1], index: 1, kind: input, shape index: {}]
  %s2 = inlined_call_operand.vmem [shape: f32[20,1], index: 2, kind: input, shape index: {}]
  %s3 = inlined_call_operand.vmem [shape: f32[20,24], index: 3, kind: input, shape index: {}]
  %s4 = inlined_call_operand.hbm [shape: f32[2,8,128], index: 4, kind: output, shape index: {}]
  %s5 = sld [smem:[#allocation0]]
  $region57: #{tpu_custom_call.1} parent=0
    _
  %s7 = ssub.s32 1, %s5
  %s8 = scalar_select 0, %s7, %s5
  $region1: #{tpu_custom_call.1} parent=0
    #allocation3 [shape = 'u8[8192]{0}', space=vmem, size = 0x2000, scoped, tag = 'output window, operand 0']
    #allocation4 [shape = 's32[2]{0}', space=sflag, size = 0x8, scoped, tag = 'scoped memory for tpu_custom_call.1']
    %9 = vsyncpa [#allocation4], 0
    %s10 = scalar_lea.sflag [#allocation4], 1
    %11 = vsyncpa %s10, 0
    loop: start=0, step=1, limit=6
    $region2: #{tpu_custom_call.1} parent=1 // loop_pre_header
      _
    $region3: #{tpu_custom_call.1} parent=1 // loop_header
      %s13 = sphi 0, %s17
      %p14 = scmp.ge.s32.totalorder %s13, 6
      %s20 = sphi 0, %s32
      %s21 = sphi 0, %s28
      %s22 = sphi 0, %s20
      %s23 = sphi 0, %s21
      %s24 = sphi 0, %s22
      %s25 = sphi 0, %s23
      %s43 = sphi 0, %s45
      %s46 = sphi 0, %s43
      %s47 = sphi 0, %s46
      %s63 = sphi 0, %s47
      %s77 = sphi 0, %s79
      %s80 = sphi 0, %s77
      %s81 = sphi 0, %s80
      %s97 = sphi 0, %s81
      %s111 = sphi 0, %s113
      %s114 = sphi 0, %s111
      %s115 = sphi 0, %s114
      %s131 = sphi 0, %s115
      %s145 = sphi 0, %s147
      %s148 = sphi 0, %s145
      %s149 = sphi 0, %s148
      %s165 = sphi 0, %s149
      %s171 = sphi 0, %s173
      %s174 = sphi 0, %s171
      %s175 = sphi 0, %s174
      %s191 = sphi 0, %s175
    $region4: #{tpu_custom_call.1} parent=1 // loop_header_branch
      %16 = sbr.rel (%p14) target = $region8
    $region5: #{tpu_custom_call.1} parent=1 // loop_body
      %s18 = ssub.s32 %s13, 1
      %s19 = ssub.s32 %s13, 2
      %s26 = sadd.s32 1, %s21
      %p27 = scmp.ge.s32.totalorder %s26, 2
      %s28 = scalar_select %p27, 0, %s26
      %s29 = sadd.s32 1, %s20
      %s30 = scalar_select %p27, %s29, %s20
      %p31 = scmp.ge.s32.totalorder %s30, 2
      %s32 = scalar_select %p31, 0, %s30
      %s33 = smul.u32 %s20, 2
      %s34 = sadd.s32 %s33, %s21
      %p35 = scmp.lt.s32.totalorder %s34, 2
      %s36 = scalar_select %p35, %s34, 2
      %s37 = smul.u32 %s32, 2
      %s38 = sadd.s32 %s37, %s28
      %p39 = scmp.lt.s32.totalorder %s38, 2
      %s40 = scalar_select %p39, %s38, 2
      %s41 = ssub.s32 %s36, %s40
      %p42 = scmp.eq.s32.totalorder %s41, 0
      %s44 = sadd.s32 %s43, 1
      %s45 = scalar_select %p42, %s43, %s44
      %p48 = pneg %p42
      %p49 = scmp.eq.s32.totalorder %s13, 3
      %p50 = por %p48, %p49
      %p51 = scmp.ne.s32.totalorder %s43, %s46
      %p52 = scmp.eq.s32.totalorder %s13, 0
      %p53 = por %p51, %p52
      %p54 = scmp.ne.s32.totalorder %s43, %s46
      %p55 = scmp.eq.s32.totalorder %s18, 3
      %p56 = por %p54, %p55
      %p57 = scmp.ne.s32.totalorder %s46, %s47
      %p58 = scmp.eq.s32.totalorder %s18, 0
      %p59 = por %p57, %p58
      %p60 = scmp.ne.s32.totalorder %s46, %s47
      %p61 = scmp.eq.s32.totalorder %s19, 3
      %p62 = por %p60, %p61
      %p64 = scmp.ne.s32.totalorder %s47, %s63
      %p65 = scmp.eq.s32.totalorder %s19, 0
      %p66 = por %p64, %p65
      %s67 = smul.u32 %s20, 2
      %s68 = sadd.s32 %s67, %s21
      %p69 = scmp.lt.s32.totalorder %s68, 2
      %s70 = scalar_select %p69, %s68, 2
      %s71 = smul.u32 %s32, 2
      %s72 = sadd.s32 %s71, %s28
      %p73 = scmp.lt.s32.totalorder %s72, 2
      %s74 = scalar_select %p73, %s72, 2
      %s75 = ssub.s32 %s70, %s74
      %p76 = scmp.eq.s32.totalorder %s75, 0
      %s78 = sadd.s32 %s77, 1
      %s79 = scalar_select %p76, %s77, %s78
      %p82 = pneg %p76
      %p83 = scmp.eq.s32.totalorder %s13, 3
      %p84 = por %p82, %p83
      %p85 = scmp.ne.s32.totalorder %s77, %s80
      %p86 = scmp.eq.s32.totalorder %s13, 0
      %p87 = por %p85, %p86
      %p88 = scmp.ne.s32.totalorder %s77, %s80
      %p89 = scmp.eq.s32.totalorder %s18, 3
      %p90 = por %p88, %p89
      %p91 = scmp.ne.s32.totalorder %s80, %s81
      %p92 = scmp.eq.s32.totalorder %s18, 0
      %p93 = por %p91, %p92
      %p94 = scmp.ne.s32.totalorder %s80, %s81
      %p95 = scmp.eq.s32.totalorder %s19, 3
      %p96 = por %p94, %p95
      %p98 = scmp.ne.s32.totalorder %s81, %s97
      %p99 = scmp.eq.s32.totalorder %s19, 0
      %p100 = por %p98, %p99
      %s101 = smul.u32 %s20, 2
      %s102 = sadd.s32 %s101, %s21
      %p103 = scmp.lt.s32.totalorder %s102, 2
      %s104 = scalar_select %p103, %s102, 2
      %s105 = smul.u32 %s32, 2
      %s106 = sadd.s32 %s105, %s28
      %p107 = scmp.lt.s32.totalorder %s106, 2
      %s108 = scalar_select %p107, %s106, 2
      %s109 = ssub.s32 %s104, %s108
      %p110 = scmp.eq.s32.totalorder %s109, 0
      %s112 = sadd.s32 %s111, 1
      %s113 = scalar_select %p110, %s111, %s112
      %p116 = pneg %p110
      %p117 = scmp.eq.s32.totalorder %s13, 3
      %p118 = por %p116, %p117
      %p119 = scmp.ne.s32.totalorder %s111, %s114
      %p120 = scmp.eq.s32.totalorder %s13, 0
      %p121 = por %p119, %p120
      %p122 = scmp.ne.s32.totalorder %s111, %s114
      %p123 = scmp.eq.s32.totalorder %s18, 3
      %p124 = por %p122, %p123
      %p125 = scmp.ne.s32.totalorder %s114, %s115
      %p126 = scmp.eq.s32.totalorder %s18, 0
      %p127 = por %p125, %p126
      %p128 = scmp.ne.s32.totalorder %s114, %s115
      %p129 = scmp.eq.s32.totalorder %s19, 3
      %p130 = por %p128, %p129
      %p132 = scmp.ne.s32.totalorder %s115, %s131
      %p133 = scmp.eq.s32.totalorder %s19, 0
      %p134 = por %p132, %p133
      %s135 = smul.u32 %s20, 2
      %s136 = sadd.s32 %s135, %s21
      %p137 = scmp.lt.s32.totalorder %s136, 2
      %s138 = scalar_select %p137, %s136, 2
      %s139 = smul.u32 %s32, 2
      %s140 = sadd.s32 %s139, %s28
      %p141 = scmp.lt.s32.totalorder %s140, 2
      %s142 = scalar_select %p141, %s140, 2
      %s143 = ssub.s32 %s138, %s142
      %p144 = scmp.eq.s32.totalorder %s143, 0
      %s146 = sadd.s32 %s145, 1
      %s147 = scalar_select %p144, %s145, %s146
      %p150 = pneg %p144
      %p151 = scmp.eq.s32.totalorder %s13, 3
      %p152 = por %p150, %p151
      %p153 = scmp.ne.s32.totalorder %s145, %s148
      %p154 = scmp.eq.s32.totalorder %s13, 0
      %p155 = por %p153, %p154
      %p156 = scmp.ne.s32.totalorder %s145, %s148
      %p157 = scmp.eq.s32.totalorder %s18, 3
      %p158 = por %p156, %p157
      %p159 = scmp.ne.s32.totalorder %s148, %s149
      %p160 = scmp.eq.s32.totalorder %s18, 0
      %p161 = por %p159, %p160
      %p162 = scmp.ne.s32.totalorder %s148, %s149
      %p163 = scmp.eq.s32.totalorder %s19, 3
      %p164 = por %p162, %p163
      %p166 = scmp.ne.s32.totalorder %s149, %s165
      %p167 = scmp.eq.s32.totalorder %s19, 0
      %p168 = por %p166, %p167
      %s169 = ssub.s32 %s20, %s32
      %p170 = scmp.eq.s32.totalorder %s169, 0
      %s172 = sadd.s32 %s171, 1
      %s173 = scalar_select %p170, %s171, %s172
      %p176 = pneg %p170
      %p177 = scmp.eq.s32.totalorder %s13, 3
      %p178 = por %p176, %p177
      %p179 = scmp.ne.s32.totalorder %s171, %s174
      %p180 = scmp.eq.s32.totalorder %s13, 0
      %p181 = por %p179, %p180
      %p182 = scmp.ne.s32.totalorder %s171, %s174
      %p183 = scmp.eq.s32.totalorder %s18, 3
      %p184 = por %p182, %p183
      %p185 = scmp.ne.s32.totalorder %s174, %s175
      %p186 = scmp.eq.s32.totalorder %s18, 0
      %p187 = por %p185, %p186
      %p188 = scmp.ne.s32.totalorder %s174, %s175
      %p189 = scmp.eq.s32.totalorder %s19, 3
      %p190 = por %p188, %p189
      %p192 = scmp.ne.s32.totalorder %s175, %s191
      %p193 = scmp.eq.s32.totalorder %s19, 0
      %p194 = por %p192, %p193
      %p195 = scmp.le.s32.totalorder 1, %s13
      %p196 = scmp.lt.s32.totalorder %s13, 5
      %p197 = pnand %p195, %p196
      %p198 = pneg %p197
      // Predicated region
      $region9: #{tpu_custom_call.1} parent=5 // pred_check
        _
      $region10: #{tpu_custom_call.1} parent=5 // pred_check_branch
        %200 = sbr.rel (%p197) target = $region12
      $region11: #{tpu_custom_call.1} parent=5 // pred_region
        %s201 = ssub.s32 %s13, 1
      $region12: #{tpu_custom_call.1} parent=5 // pred_fallthru
        _
      %p202 = scmp.lt.s32.totalorder %s13, 4
      // Predicated region
      $region13: #{tpu_custom_call.1} parent=5 // pred_check
        %p203 = pneg %p202
      $region14: #{tpu_custom_call.1} parent=5 // pred_check_branch
        %205 = sbr.rel (%p203) target = $region16
      $region15: #{tpu_custom_call.1} parent=5 // pred_region
        // Predicated region
        $region17: #{tpu_custom_call.1} parent=15 // pred_check
          %p206 = pneg %p53
        $region18: #{tpu_custom_call.1} parent=15 // pred_check_branch
          %208 = sbr.rel (%p206) target = $region20
        $region19: #{tpu_custom_call.1} parent=15 // pred_region
          %s209 = smul.u32 %s20, 2
          %s210 = sadd.s32 %s209, %s21
          %p211 = scmp.lt.s32.totalorder %s210, 2
          %s212 = scalar_select %p211, %s210, 2
          %p213 = scmp.lt.s32.totalorder %s212, 2
          %s214 = scalar_select %p213, %s212, 2
          %s215 = smul.addr %s214, 8
          %s216 = scalar_lea.vmem %s0, %s215
          %s217 = smul.u32 %s20, 2
          %s218 = sadd.s32 %s217, %s21
          %p219 = scmp.lt.s32.totalorder %s218, 2
          %s220 = scalar_select %p219, %s218, 2
        $region20: #{tpu_custom_call.1} parent=15 // pred_fallthru
          _
        // Predicated region
        $region21: #{tpu_custom_call.1} parent=15 // pred_check
          %p221 = pneg %p87
        $region22: #{tpu_custom_call.1} parent=15 // pred_check_branch
          %223 = sbr.rel (%p221) target = $region24
        $region23: #{tpu_custom_call.1} parent=15 // pred_region
          %s224 = smul.u32 %s20, 2
          %s225 = sadd.s32 %s224, %s21
          %p226 = scmp.lt.s32.totalorder %s225, 2
          %s227 = scalar_select %p226, %s225, 2
          %p228 = scmp.lt.s32.totalorder %s227, 2
          %s229 = scalar_select %p228, %s227, 2
          %s230 = smul.addr %s229, 8
          %s231 = scalar_lea.vmem %s1, %s230
          %s232 = smul.u32 %s20, 2
          %s233 = sadd.s32 %s232, %s21
          %p234 = scmp.lt.s32.totalorder %s233, 2
          %s235 = scalar_select %p234, %s233, 2
        $region24: #{tpu_custom_call.1} parent=15 // pred_fallthru
          _
        // Predicated region
        $region25: #{tpu_custom_call.1} parent=15 // pred_check
          %p236 = pneg %p121
        $region26: #{tpu_custom_call.1} parent=15 // pred_check_branch
          %238 = sbr.rel (%p236) target = $region28
        $region27: #{tpu_custom_call.1} parent=15 // pred_region
          %s239 = smul.u32 %s20, 2
          %s240 = sadd.s32 %s239, %s21
          %p241 = scmp.lt.s32.totalorder %s240, 2
          %s242 = scalar_select %p241, %s240, 2
          %p243 = scmp.lt.s32.totalorder %s242, 2
          %s244 = scalar_select %p243, %s242, 2
          %s245 = smul.addr %s244, 8
          %s246 = scalar_lea.vmem %s2, %s245
          %s247 = smul.u32 %s20, 2
          %s248 = sadd.s32 %s247, %s21
          %p249 = scmp.lt.s32.totalorder %s248, 2
          %s250 = scalar_select %p249, %s248, 2
        $region28: #{tpu_custom_call.1} parent=15 // pred_fallthru
          _
        // Predicated region
        $region29: #{tpu_custom_call.1} parent=15 // pred_check
          %p251 = pneg %p155
        $region30: #{tpu_custom_call.1} parent=15 // pred_check_branch
          %253 = sbr.rel (%p251) target = $region32
        $region31: #{tpu_custom_call.1} parent=15 // pred_region
          %s254 = smul.u32 %s20, 2
          %s255 = sadd.s32 %s254, %s21
          %p256 = scmp.lt.s32.totalorder %s255, 2
          %s257 = scalar_select %p256, %s255, 2
          %p258 = scmp.lt.s32.totalorder %s257, 2
          %s259 = scalar_select %p258, %s257, 2
          %s260 = smul.addr %s259, 8
          %s261 = scalar_lea.vmem %s3, %s260
          %s262 = smul.u32 %s20, 2
          %s263 = sadd.s32 %s262, %s21
          %p264 = scmp.lt.s32.totalorder %s263, 2
          %s265 = scalar_select %p264, %s263, 2
        $region32: #{tpu_custom_call.1} parent=15 // pred_fallthru
          _
      $region16: #{tpu_custom_call.1} parent=5 // pred_fallthru
        _
      %p266 = scmp.le.s32.totalorder 1, %s13
      %p267 = scmp.lt.s32.totalorder %s13, 5
      %p268 = pnand %p266, %p267
      %p269 = pneg %p268
      // Predicated region
      $region33: #{tpu_custom_call.1} parent=5 // pred_check
        _
      $region34: #{tpu_custom_call.1} parent=5 // pred_check_branch
        %271 = sbr.rel (%p268) target = $region36
      $region35: #{tpu_custom_call.1} parent=5 // pred_region
        %s272 = ssub.s32 %s13, 1
        %s273 = smul.u32 %s22, 2
        %s274 = sadd.s32 %s273, %s23
        %p275 = scmp.lt.s32.totalorder %s274, 2
        %s276 = scalar_select %p275, %s274, 2
        %p277 = scmp.lt.s32.totalorder %s276, 2
        %s278 = scalar_select %p277, %s276, 2
        %s279 = smul.addr %s278, 8
        %s280 = scalar_lea.vmem %s0, %s279
        %p281 = pneg %p59
        %p282 = pneg %p56
        %s283 = smul.u32 %s22, 2
        %s284 = sadd.s32 %s283, %s23
        %p285 = scmp.lt.s32.totalorder %s284, 2
        %s286 = scalar_select %p285, %s284, 2
        %p287 = scmp.lt.s32.totalorder %s286, 2
        %s288 = scalar_select %p287, %s286, 2
        %s289 = smul.addr %s288, 8
        %s290 = scalar_lea.vmem %s1, %s289
        %p291 = pneg %p93
        %p292 = pneg %p90
        %s293 = smul.u32 %s22, 2
        %s294 = sadd.s32 %s293, %s23
        %p295 = scmp.lt.s32.totalorder %s294, 2
        %s296 = scalar_select %p295, %s294, 2
        %p297 = scmp.lt.s32.totalorder %s296, 2
        %s298 = scalar_select %p297, %s296, 2
        %s299 = smul.addr %s298, 8
        %s300 = scalar_lea.vmem %s2, %s299
        %p301 = pneg %p127
        %p302 = pneg %p124
        %s303 = smul.u32 %s22, 2
        %s304 = sadd.s32 %s303, %s23
        %p305 = scmp.lt.s32.totalorder %s304, 2
        %s306 = scalar_select %p305, %s304, 2
        %p307 = scmp.lt.s32.totalorder %s306, 2
        %s308 = scalar_select %p307, %s306, 2
        %s309 = smul.addr %s308, 8
        %s310 = scalar_lea.vmem %s3, %s309
        %p311 = pneg %p161
        %p312 = pneg %p158
        %p313 = pneg %p187
        %p314 = pneg %p184
        %s315 = sand.u32 %s174, 1
        %s316 = scalar_lea.sflag [#allocation4], %s315
        %s317 = sand.u32 %s174, 1
        %s318 = smul.addr %s317, 8
        %s319 = scalar_lea.vmem [#allocation3], %s318
        %s320 = smul.u32 %s22, 2
        %s321 = sadd.s32 %s320, %s23
        %p322 = scmp.lt.s32.totalorder %s321, 2
        %s323 = scalar_select %p322, %s321, 2
        %p324 = scmp.lt.s32.totalorder %s323, 2
        %s325 = scalar_select %p324, %s323, 2
        %s326 = smul.addr %s325, 8
        %s327 = scalar_lea.vmem %s0, %s326
        %s328 = smul.u32 %s22, 2
        %s329 = sadd.s32 %s328, %s23
        %p330 = scmp.lt.s32.totalorder %s329, 2
        %s331 = scalar_select %p330, %s329, 2
        %s332 = smul.u32 %s22, 2
        %s333 = sadd.s32 %s332, %s23
        %p334 = scmp.lt.s32.totalorder %s333, 2
        %s335 = scalar_select %p334, %s333, 2
        %p336 = scmp.lt.s32.totalorder %s335, 2
        %s337 = scalar_select %p336, %s335, 2
        %s338 = smul.addr %s337, 8
        %s339 = scalar_lea.vmem %s1, %s338
        %s340 = smul.u32 %s22, 2
        %s341 = sadd.s32 %s340, %s23
        %p342 = scmp.lt.s32.totalorder %s341, 2
        %s343 = scalar_select %p342, %s341, 2
        %s344 = smul.u32 %s22, 2
        %s345 = sadd.s32 %s344, %s23
        %p346 = scmp.lt.s32.totalorder %s345, 2
        %s347 = scalar_select %p346, %s345, 2
        %p348 = scmp.lt.s32.totalorder %s347, 2
        %s349 = scalar_select %p348, %s347, 2
        %s350 = smul.addr %s349, 8
        %s351 = scalar_lea.vmem %s2, %s350
        %s352 = smul.u32 %s22, 2
        %s353 = sadd.s32 %s352, %s23
        %p354 = scmp.lt.s32.totalorder %s353, 2
        %s355 = scalar_select %p354, %s353, 2
        %s356 = smul.u32 %s22, 2
        %s357 = sadd.s32 %s356, %s23
        %p358 = scmp.lt.s32.totalorder %s357, 2
        %s359 = scalar_select %p358, %s357, 2
        %p360 = scmp.lt.s32.totalorder %s359, 2
        %s361 = scalar_select %p360, %s359, 2
        %s362 = smul.addr %s361, 8
        %s363 = scalar_lea.vmem %s3, %s362
        %s364 = smul.u32 %s22, 2
        %s365 = sadd.s32 %s364, %s23
        %p366 = scmp.lt.s32.totalorder %s365, 2
        %s367 = scalar_select %p366, %s365, 2
        %p368 = scmp.eq.s32.totalorder %s23, 0
        // Predicated region
        $region37: #{tpu_custom_call.1} parent=35 // pred_check
          %p369 = pneg %p368
        $region38: #{tpu_custom_call.1} parent=35 // pred_check_branch
          %371 = sbr.rel (%p369) target = $region40
        $region39: #{tpu_custom_call.1} parent=35 // pred_region
          %s372 = scalar_lea.smem [#allocation2], 0
          %373 = sst [smem:[%s372]] 0.0
        $region40: #{tpu_custom_call.1} parent=35 // pred_fallthru
          _
        %v374 = vld [vmem:[%s363] sm:$0xff]
        %v375 = vld [vmem:[%s327] sm:$0xff]
        %v376 = vld [vmem:[%s339] sm:$0xff]
        %v377 = vld [vmem:[%s351] sm:$0xff]
        %v378 = vlaneseq
        %v379 = vand.u32 %v378, 127
        %380 = vset.pattern.permute.xlu0 0
        %381 = vperm.xlu0 %380, %v375
        %v382 = vpop.permute.xlu0 %381
        %vm383 = vcmp.eq.s32.totalorder %v379, %v382
        %385 = vset.pattern.permute.xlu0 0
        %386 = vperm.xlu0 %385, %v376
        %v387 = vpop.permute.xlu0 %386
        %v389 = vsub.f32 %v374, %v387
        %v390 = vsel %vm383, %v389, %v374
        %vm391 = vcmask 195584
        %v392 = vsel %vm391, %v390, -inf
        %393 = vmax.xlane.f32.xlu0 %v392
        %v394 = vpop.xlane.xlu0 %393
        %v395 = vsub.f32 %v390, %v394
        %v396 = vmul.f32 %v395, 1.442695
        %v397 = vpow.pop %v396
        %v398 = vsel %vm391, %v397, 0.0
        %399 = vadd.xlane.f32.xlu0 %v398
        %v400 = vpop.xlane.xlu0 %399
        %v401 = vlog2.pop %v400
        %v402 = vmul.f32 %v401, 0.6931472
        %v403 = vsel %vm383, %v389, 0.0
        %v404 = vsel %vm391, %v403, 0.0
        %405 = vadd.xlane.f32.xlu0 %v404
        %v406 = vpop.xlane.xlu0 %405
        %v407 = vadd.f32 %v402, %v394
        %v408 = vsub.f32 %v407, %v406
        %s409 = smul.u32 %s22, 2
        %s410 = sadd.s32 %s409, %s23
        %s411 = smul.u32 %s410, 8
        %v412 = vlaneseq
        %v413 = vshrl.u32 %v412, 7
        %v414 = vstv %s411
        %v415 = vadd.s32 %v414, %v413
        %s416 = sld [smem:[#allocation2]]
        %vm417 = vcmp.lt.s32.totalorder %v415, 20
        %v418 = vmul.f32 %v377, %v408
        %v419 = vsel %vm417, %v418, 0.0
        %vm420 = vcmask 7168
        %v421 = vsel %vm420, %v419, 0.0
        %422 = vadd.xlane.f32.xlu0 %v421
        %v423 = vpop.xlane.xlu0 %422
        %v424 = vrot.slane %v423, 4
        %v425 = vadd.f32 %v423, %v424
        %v426 = vrot.slane %v425, 2
        %v427 = vadd.f32 %v425, %v426
        %v428 = vrot.slane %v427, 1
        %v429 = vadd.f32 %v427, %v428
        %s430 = vtos %v429
        %s431 = sadd.f32 %s416, %s430
        %s432 = scalar_lea.smem [#allocation2], 0
        %433 = sst [smem:[%s432]] %s431
        %p434 = scmp.eq.s32.totalorder %s23, 1
        // Predicated region
        $region41: #{tpu_custom_call.1} parent=35 // pred_check
          %p435 = pneg %p434
        $region42: #{tpu_custom_call.1} parent=35 // pred_check_branch
          %437 = sbr.rel (%p435) target = $region44
        $region43: #{tpu_custom_call.1} parent=35 // pred_region
          %s438 = sld [smem:[#allocation2]]
          %v439 = vstv %s438
          %440 = vst [vmem:[%s319] sm:$0xff] %v439
        $region44: #{tpu_custom_call.1} parent=35 // pred_fallthru
          _
        %s441 = sand.u32 %s174, 1
        %s442 = scalar_lea.sflag [#allocation4], %s441
        %s443 = sand.u32 %s174, 1
        %s444 = smul.addr %s443, 8
        %s445 = scalar_lea.vmem [#allocation3], %s444
        // Predicated region
        $region45: #{tpu_custom_call.1} parent=35 // pred_check
          %p446 = pneg %p184
        $region46: #{tpu_custom_call.1} parent=35 // pred_check_branch
          %448 = sbr.rel (%p446) target = $region48
        $region47: #{tpu_custom_call.1} parent=35 // pred_region
          %s450 = ssub.s32 128, 128
          %451 = vsyncadd %s442, %s450
          %s452 = smul.addr %s22, 128
          %s453 = scalar_lea.hbm %s4, %s452
          %s455 = sshll.u32 %s445, 4
          %s456 = int_to_ptr.vmem [resolvable:$true] %s455
          %458 = dma.vmem_to_hbm [thread:$0]  %s456, 128, %s453, %s442
        $region48: #{tpu_custom_call.1} parent=35 // pred_fallthru
          _
      $region36: #{tpu_custom_call.1} parent=5 // pred_fallthru
        _
      %p459 = scmp.le.s32.totalorder 2, %s13
      // Predicated region
      $region49: #{tpu_custom_call.1} parent=5 // pred_check
        %p460 = pneg %p459
      $region50: #{tpu_custom_call.1} parent=5 // pred_check_branch
        %462 = sbr.rel (%p460) target = $region52
      $region51: #{tpu_custom_call.1} parent=5 // pred_region
        %s463 = ssub.s32 %s13, 2
        // Predicated region
        $region53: #{tpu_custom_call.1} parent=51 // pred_check
          %p464 = pneg %p190
        $region54: #{tpu_custom_call.1} parent=51 // pred_check_branch
          %466 = sbr.rel (%p464) target = $region56
        $region55: #{tpu_custom_call.1} parent=51 // pred_region
          %s467 = sand.u32 %s175, 1
          %s468 = scalar_lea.sflag [#allocation4], %s467
          %s469 = sand.u32 %s175, 1
          %s470 = smul.addr %s469, 8
          %s471 = scalar_lea.vmem [#allocation3], %s470
          %472 = dma.done %s468, 128
        $region56: #{tpu_custom_call.1} parent=51 // pred_fallthru
          _
      $region52: #{tpu_custom_call.1} parent=5 // pred_fallthru
        _
    $region6: #{tpu_custom_call.1} parent=1 // loop_footer
      %s17 = sadd.s32 1, %s13
    $region7: #{tpu_custom_call.1} parent=1 // loop_footer_branch
      %12 = sbr.rel target = $region3
    $region8: #{tpu_custom_call.1} parent=1 // loop_exit
      _
    %473 = vsyncpa [#allocation4], 1
    %s474 = scalar_lea.sflag [#allocation4], 1
    %475 = vsyncpa %s474, 1

</llo_original>
